<compile_context>
chip_gen: v7x
topology: tpu7x:2x2x1
jax: 0.10.0
libtpu: 0.0.40
codegen_flags: <defaults>
</compile_context>

<pallas_src>
import jax
import jax.numpy as jnp
from jax.experimental import pallas as pl
from jax.experimental.pallas import tpu as pltpu


def _mlp_kernel(w_ref, x_ref, y_ref):
    # w_ref: SMEM (8,) f32 = rows of the folded (4, 2) weight:
    #        [w1_00, w1_01, w1_10, w1_11, w1_20, w1_21, wo_0, wo_1]
    # x_ref: VMEM (2, R, 128) f32  -- feature plane, then (row, lane) = batch
    # y_ref: VMEM (4, R, 128) f32  -- planes 0..2 = h1 components, plane 3 = out
    x0 = x_ref[0]  # (R, 128) dense vregs, all sublanes live
    x1 = x_ref[1]

    # 4 independent broadcast FMAs per vreg group on the VPU; lane-dense,
    # full-width stores (no masked vst).
    y_ref[0] = w_ref[0] * x0 + w_ref[1] * x1
    y_ref[1] = w_ref[2] * x0 + w_ref[3] * x1
    y_ref[2] = w_ref[4] * x0 + w_ref[5] * x1
    y_ref[3] = w_ref[6] * x0 + w_ref[7] * x1


def nn_forward(x, w1, w2, *, tb=131072):
    """x: (B, 2); w1: (3, 2) torch-style; w2: (3,) torch-style 1-D weight.

    Returns (h1, out) with h1: (B, 3), out: (B,) -- matches the PyTorch module.
    `tb` is a *cap* on batch lanes per grid step (multiple of 128).
    """
    B = x.shape[0]

    # ---- tile derivation: rows of 128 batch lanes -------------------------
    r_total = pl.cdiv(B, 128)                       # 128-lane rows needed
    r_cap = max(8, (int(tb) // 128) // 8 * 8)       # cap in rows, multiple of 8
    n_steps = pl.cdiv(r_total, r_cap)
    if n_steps > 1 and n_steps % 2 != 0:            # even grids keep both v7x TCs fed
        n_steps += 1
    r_blk = pl.cdiv(pl.cdiv(r_total, n_steps), 8) * 8   # rows/step, mult of 8
    rp = n_steps * r_blk                            # total padded rows (waste <= 8*n_steps)
    Bp = rp * 128                                   # padded batch

    # ---- host-side packing -------------------------------------------------
    # TODO(synk): the (B,2)->(2,B) transpose and the h1 transpose in the
    # epilogue are XLA copies; avoiding them needs the caller to consume the
    # lane-major packed layout directly.
    xt = jnp.asarray(x, jnp.float32).T              # (2, B)
    if Bp != B:
        xt = jnp.pad(xt, ((0, 0), (0, Bp - B)))     # zero pad (sliced off below)
    xt = xt.reshape(2, rp, 128)                     # free reshape (contiguous)

    # Fold layer 2 into an effective (4, 2) weight: rows 0..2 = W1, row 3 = w2^T @ W1.
    w1f = jnp.asarray(w1, jnp.float32)              # (3, 2)
    w2f = jnp.asarray(w2, jnp.float32)              # (3,)
    w_eff = jnp.concatenate([w1f.reshape(-1), (w2f @ w1f).reshape(-1)])  # (8,)

    y = pl.pallas_call(
        _mlp_kernel,
        out_shape=jax.ShapeDtypeStruct((4, rp, 128), jnp.float32),
        grid_spec=pltpu.PrefetchScalarGridSpec(
            num_scalar_prefetch=0,
            grid=(n_steps,),
            in_specs=[
                pl.BlockSpec(memory_space=pltpu.MemorySpace.SMEM),      # 8 weight scalars
                pl.BlockSpec((2, r_blk, 128), lambda i: (0, i, 0)),     # x tile
            ],
            out_specs=pl.BlockSpec((4, r_blk, 128), lambda i: (0, i, 0)),  # packed h1|out
        ),
        compiler_params=pltpu.CompilerParams(
            dimension_semantics=("parallel",),      # shard batch tiles across TCs
        ),
    )(w_eff, xt)

    y2 = y.reshape(4, Bp)[:, :B]
    h1 = y2[0:3, :].T        # (B, 3)
    out = y2[3, :]           # (B,)  -- 1-D, as PyTorch's 1-D out_layer weight yields
    return h1, out


def _check(x, w1, w2, **kw):
    h1, out = nn_forward(x, w1, w2, **kw)
    jax.block_until_ready((h1, out))
    h1_ref = x @ w1.T
    out_ref = h1_ref @ w2
    assert h1.shape == (x.shape[0], 3) and out.shape == (x.shape[0],)
    assert jnp.allclose(h1, h1_ref, atol=1e-5, rtol=1e-5)
    assert jnp.allclose(out, out_ref, atol=1e-5, rtol=1e-5)


if __name__ == "__main__":
    # Deterministic parameters, exactly as in NN._initialize_weights().
    w1 = jnp.array([[0.5, 0.25],
                    [0.2, 0.4],
                    [0.9, 0.8]], dtype=jnp.float32)     # input_layer.weight (3, 2)
    w2 = jnp.array([0.1, 0.5, 0.3], dtype=jnp.float32)  # out_layer.weight (3,)

    key = jax.random.PRNGKey(0)

    # Small deterministic example input, batch=4, in_features=2 (single grid step).
    x_small = jax.random.normal(key, (4, 2), dtype=jnp.float32)
    _check(x_small, w1, w2)

    # Multi-step / padded path: small lane cap forces a 2-step (even) grid.
    x_multi = jax.random.normal(jax.random.PRNGKey(0), (2000, 2), dtype=jnp.float32)
    _check(x_multi, w1, w2, tb=1024)

    print("KERNEL_OK")
</pallas_src>

<mosaic_0001>
module attributes {stable_mosaic.version = 11 : i64} {
  func.func @_mlp_kernel(%arg0: i32, %arg1: memref<8xf32, #tpu.memory_space<smem>>, %arg2: memref<2x8x128xf32, #tpu.memory_space<vmem>>, %arg3: memref<4x8x128xf32, #tpu.memory_space<vmem>>) attributes {dimension_semantics = [#tpu.dimension_semantics<parallel>], iteration_bounds = array<i64: 1>, scalar_prefetch = 0 : i64, scratch_operands = 0 : i64, tpu.core_type = #tpu.core_type<tc>, window_params = [{transform_indices = @transform_0, window_bounds = array<i64: 8>}, {transform_indices = @transform_1, window_bounds = array<i64: 2, 8, 128>}, {transform_indices = @transform_2, window_bounds = array<i64: 4, 8, 128>}]} {
    %c0 = arith.constant 0 : index
    %c0_0 = arith.constant 0 : index
    %c0_1 = arith.constant 0 : index
    %0 = vector.load %arg2[%c0, %c0_0, %c0_1] : memref<2x8x128xf32, #tpu.memory_space<vmem>>, vector<1x8x128xf32>
    %1 = vector.shape_cast %0 : vector<1x8x128xf32> to vector<8x128xf32>
    %c1 = arith.constant 1 : index
    %c0_2 = arith.constant 0 : index
    %c0_3 = arith.constant 0 : index
    %2 = vector.load %arg2[%c1, %c0_2, %c0_3] : memref<2x8x128xf32, #tpu.memory_space<vmem>>, vector<1x8x128xf32>
    %3 = vector.shape_cast %2 : vector<1x8x128xf32> to vector<8x128xf32>
    %c0_4 = arith.constant 0 : index
    %4 = memref.load %arg1[%c0_4] : memref<8xf32, #tpu.memory_space<smem>>
    %5 = vector.broadcast %4 : f32 to vector<8x128xf32>
    %6 = arith.mulf %5, %1 : vector<8x128xf32>
    %c1_5 = arith.constant 1 : index
    %7 = memref.load %arg1[%c1_5] : memref<8xf32, #tpu.memory_space<smem>>
    %8 = vector.broadcast %7 : f32 to vector<8x128xf32>
    %9 = arith.mulf %8, %3 : vector<8x128xf32>
    %10 = arith.addf %6, %9 : vector<8x128xf32>
    %c0_6 = arith.constant 0 : index
    %c0_7 = arith.constant 0 : index
    %c0_8 = arith.constant 0 : index
    %11 = vector.load %arg3[%c0_6, %c0_7, %c0_8] : memref<4x8x128xf32, #tpu.memory_space<vmem>>, vector<1x8x128xf32>
    %12 = vector.shape_cast %11 : vector<1x8x128xf32> to vector<8x128xf32>
    %13 = vector.shape_cast %10 : vector<8x128xf32> to vector<1x8x128xf32>
    tpu.vector_store %arg3[%c0_6, %c0_7, %c0_8], %13 {strides = array<i32>} : memref<4x8x128xf32, #tpu.memory_space<vmem>>, vector<1x8x128xf32>,
    %c2 = arith.constant 2 : index
    %14 = memref.load %arg1[%c2] : memref<8xf32, #tpu.memory_space<smem>>
    %15 = vector.broadcast %14 : f32 to vector<8x128xf32>
    %16 = arith.mulf %15, %1 : vector<8x128xf32>
    %c3 = arith.constant 3 : index
    %17 = memref.load %arg1[%c3] : memref<8xf32, #tpu.memory_space<smem>>
    %18 = vector.broadcast %17 : f32 to vector<8x128xf32>
    %19 = arith.mulf %18, %3 : vector<8x128xf32>
    %20 = arith.addf %16, %19 : vector<8x128xf32>
    %c1_9 = arith.constant 1 : index
    %c0_10 = arith.constant 0 : index
    %c0_11 = arith.constant 0 : index
    %21 = vector.load %arg3[%c1_9, %c0_10, %c0_11] : memref<4x8x128xf32, #tpu.memory_space<vmem>>, vector<1x8x128xf32>
    %22 = vector.shape_cast %21 : vector<1x8x128xf32> to vector<8x128xf32>
    %23 = vector.shape_cast %20 : vector<8x128xf32> to vector<1x8x128xf32>
    tpu.vector_store %arg3[%c1_9, %c0_10, %c0_11], %23 {strides = array<i32>} : memref<4x8x128xf32, #tpu.memory_space<vmem>>, vector<1x8x128xf32>,
    %c4 = arith.constant 4 : index
    %24 = memref.load %arg1[%c4] : memref<8xf32, #tpu.memory_space<smem>>
    %25 = vector.broadcast %24 : f32 to vector<8x128xf32>
    %26 = arith.mulf %25, %1 : vector<8x128xf32>
    %c5 = arith.constant 5 : index
    %27 = memref.load %arg1[%c5] : memref<8xf32, #tpu.memory_space<smem>>
    %28 = vector.broadcast %27 : f32 to vector<8x128xf32>
    %29 = arith.mulf %28, %3 : vector<8x128xf32>
    %30 = arith.addf %26, %29 : vector<8x128xf32>
    %c2_12 = arith.constant 2 : index
    %c0_13 = arith.constant 0 : index
    %c0_14 = arith.constant 0 : index
    %31 = vector.load %arg3[%c2_12, %c0_13, %c0_14] : memref<4x8x128xf32, #tpu.memory_space<vmem>>, vector<1x8x128xf32>
    %32 = vector.shape_cast %31 : vector<1x8x128xf32> to vector<8x128xf32>
    %33 = vector.shape_cast %30 : vector<8x128xf32> to vector<1x8x128xf32>
    tpu.vector_store %arg3[%c2_12, %c0_13, %c0_14], %33 {strides = array<i32>} : memref<4x8x128xf32, #tpu.memory_space<vmem>>, vector<1x8x128xf32>,
    %c6 = arith.constant 6 : index
    %34 = memref.load %arg1[%c6] : memref<8xf32, #tpu.memory_space<smem>>
    %35 = vector.broadcast %34 : f32 to vector<8x128xf32>
    %36 = arith.mulf %35, %1 : vector<8x128xf32>
    %c7 = arith.constant 7 : index
    %37 = memref.load %arg1[%c7] : memref<8xf32, #tpu.memory_space<smem>>
    %38 = vector.broadcast %37 : f32 to vector<8x128xf32>
    %39 = arith.mulf %38, %3 : vector<8x128xf32>
    %40 = arith.addf %36, %39 : vector<8x128xf32>
    %c3_15 = arith.constant 3 : index
    %c0_16 = arith.constant 0 : index
    %c0_17 = arith.constant 0 : index
    %41 = vector.load %arg3[%c3_15, %c0_16, %c0_17] : memref<4x8x128xf32, #tpu.memory_space<vmem>>, vector<1x8x128xf32>
    %42 = vector.shape_cast %41 : vector<1x8x128xf32> to vector<8x128xf32>
    %43 = vector.shape_cast %40 : vector<8x128xf32> to vector<1x8x128xf32>
    tpu.vector_store %arg3[%c3_15, %c0_16, %c0_17], %43 {strides = array<i32>} : memref<4x8x128xf32, #tpu.memory_space<vmem>>, vector<1x8x128xf32>,
    return
  }
  func.func @transform_0(%arg0: i32) -> i32 {
    %c0_i32 = arith.constant 0 : i32
    %c0_i32_0 = arith.constant 0 : i32
    return %c0_i32 : i32
  }
  func.func @transform_1(%arg0: i32) -> (i32, i32, i32) {
    %c0_i32 = arith.constant 0 : i32
    %c0_i32_0 = arith.constant 0 : i32
    %c0_i32_1 = arith.constant 0 : i32
    return %c0_i32, %arg0, %c0_i32_0 : i32, i32, i32
  }
  func.func @transform_2(%arg0: i32) -> (i32, i32, i32) {
    %c0_i32 = arith.constant 0 : i32
    %c0_i32_0 = arith.constant 0 : i32
    %c0_i32_1 = arith.constant 0 : i32
    return %c0_i32, %arg0, %c0_i32_0 : i32, i32, i32
  }
}

</mosaic_0001>

<llo_original>
// kernel: tpu_custom_call.1
$region0: #{tpu_custom_call.1}
  #allocation0 [shape = 'u32[]', space=smem, size = 0x4, offset = 0x4, fixed_abs, tag = 'smem constant byte address 0x4 - core index']
  #allocation1 [shape = 'u32[144,128]{1,0:T(1,128)}', space=vmem, size = 0x12000, scoped, tag = 'internal scratch']
  %s0 = inlined_call_operand.hbm [shape: f32[8], index: 0, kind: input, shape index: {}]
  %s1 = inlined_call_operand.hbm [shape: f32[2,8,128], index: 1, kind: input, shape index: {}]
  %s2 = inlined_call_operand.hbm [shape: f32[4,8,128], index: 2, kind: output, shape index: {}]
  %s3 = sld [smem:[#allocation0]]
  $region26: #{tpu_custom_call.1} parent=0
    _
  %s5 = ssub.s32 1, %s3
  %s6 = scalar_select 0, %s5, %s3
  $region1: #{tpu_custom_call.1} parent=0
    #allocation2 [shape = 'u8[512]{0}', space=smem, size = 0x200, scoped, tag = 'input window, operand 0, single buffered']
    #allocation3 [shape = 's32[1]{0}', space=sflag, size = 0x4, scoped, tag = 'scoped memory for tpu_custom_call.1']
    #allocation4 [shape = 's32[1]{0}', space=sflag, size = 0x4, scoped, tag = 'scoped memory for tpu_custom_call.1']
    #allocation5 [shape = 's32[1]{0}', space=sflag, size = 0x4, scoped, tag = 'scoped memory for tpu_custom_call.1']
    #allocation6 [shape = 'u8[8192]{0}', space=vmem, size = 0x2000, scoped, tag = 'input window, operand 1, single buffered']
    #allocation7 [shape = 'u8[16384]{0}', space=vmem, size = 0x4000, scoped, tag = 'output window, operand 0, single buffered']
    %7 = vsyncpa [#allocation5], 0
    %8 = vsyncpa [#allocation3], 0
    %9 = vsyncpa [#allocation4], 0
    // Predicated region
    $region2: #{tpu_custom_call.1} parent=1 // pred_check
      _
    $region3: #{tpu_custom_call.1} parent=1 // pred_check_branch
      %11 = sbr.rel (0) target = $region5
    $region4: #{tpu_custom_call.1} parent=1 // pred_region
      %s13 = ssub.s32 16, 16
      %14 = vsyncadd [#allocation5], %s13
      %17 = dma.hbm_to_smem %s0, 16, [#allocation2], [#allocation5]
    $region5: #{tpu_custom_call.1} parent=1 // pred_fallthru
      _
    // Predicated region
    $region6: #{tpu_custom_call.1} parent=1 // pred_check
      _
    $region7: #{tpu_custom_call.1} parent=1 // pred_check_branch
      %19 = sbr.rel (0) target = $region9
    $region8: #{tpu_custom_call.1} parent=1 // pred_region
      %s21 = ssub.s32 256, 256
      %22 = vsyncadd [#allocation3], %s21
      %s23 = sshll.u32 [#allocation6], 4
      %s24 = int_to_ptr.vmem [resolvable:$true] %s23
      %29 = dma.hbm_to_vmem [thread:$0]  %s1, 256, %s24, [#allocation3], 128, 128, 8
    $region9: #{tpu_custom_call.1} parent=1 // pred_fallthru
      _
    // Predicated region
    $region10: #{tpu_custom_call.1} parent=1 // pred_check
      _
    $region11: #{tpu_custom_call.1} parent=1 // pred_check_branch
      %31 = sbr.rel (0) target = $region13
    $region12: #{tpu_custom_call.1} parent=1 // pred_region
      %32 = dma.done [#allocation5], 16
    $region13: #{tpu_custom_call.1} parent=1 // pred_fallthru
      _
    // Predicated region
    $region14: #{tpu_custom_call.1} parent=1 // pred_check
      _
    $region15: #{tpu_custom_call.1} parent=1 // pred_check_branch
      %34 = sbr.rel (0) target = $region17
    $region16: #{tpu_custom_call.1} parent=1 // pred_region
      %35 = dma.done [#allocation3], 256
    $region17: #{tpu_custom_call.1} parent=1 // pred_fallthru
      _
    %36 = sfence
    %v37 = vld [vmem:[#allocation6] sm:$0xff]
    %s38 = scalar_lea.vmem [#allocation6], 8
    %v39 = vld [vmem:[%s38] sm:$0xff]
    %s40 = sld [smem:[#allocation2]]
    %v41 = vstv %s40
    %v42 = vmul.f32 %v41, %v37
    %s43 = sld [smem:[#allocation2 + $0x1]]
    %v44 = vstv %s43
    %v45 = vmul.f32 %v44, %v39
    %v46 = vadd.f32 %v42, %v45
    %47 = vst [vmem:[#allocation7] sm:$0xff] %v46
    %s48 = sld [smem:[#allocation2 + $0x2]]
    %v49 = vstv %s48
    %v50 = vmul.f32 %v49, %v37
    %s51 = sld [smem:[#allocation2 + $0x3]]
    %v52 = vstv %s51
    %v53 = vmul.f32 %v52, %v39
    %v54 = vadd.f32 %v50, %v53
    %s55 = scalar_lea.vmem [#allocation7], 8
    %56 = vst [vmem:[%s55] sm:$0xff] %v54
    %s57 = sld [smem:[#allocation2 + $0x4]]
    %v58 = vstv %s57
    %v59 = vmul.f32 %v58, %v37
    %s60 = sld [smem:[#allocation2 + $0x5]]
    %v61 = vstv %s60
    %v62 = vmul.f32 %v61, %v39
    %v63 = vadd.f32 %v59, %v62
    %s64 = scalar_lea.vmem [#allocation7], 16
    %65 = vst [vmem:[%s64] sm:$0xff] %v63
    %s66 = sld [smem:[#allocation2 + $0x6]]
    %v67 = vstv %s66
    %v68 = vmul.f32 %v67, %v37
    %s69 = sld [smem:[#allocation2 + $0x7]]
    %v70 = vstv %s69
    %v71 = vmul.f32 %v70, %v39
    %v72 = vadd.f32 %v68, %v71
    %s73 = scalar_lea.vmem [#allocation7], 24
    %74 = vst [vmem:[%s73] sm:$0xff] %v72
    // Predicated region
    $region18: #{tpu_custom_call.1} parent=1 // pred_check
      _
    $region19: #{tpu_custom_call.1} parent=1 // pred_check_branch
      %76 = sbr.rel (0) target = $region21
    $region20: #{tpu_custom_call.1} parent=1 // pred_region
      %s78 = ssub.s32 512, 512
      %79 = vsyncadd [#allocation4], %s78
      %s80 = sshll.u32 [#allocation7], 4
      %s81 = int_to_ptr.vmem [resolvable:$true] %s80
      %86 = dma.vmem_to_hbm [thread:$0]  %s81, 512, %s2, [#allocation4], 128, 128, 8
    $region21: #{tpu_custom_call.1} parent=1 // pred_fallthru
      _
    // Predicated region
    $region22: #{tpu_custom_call.1} parent=1 // pred_check
      _
    $region23: #{tpu_custom_call.1} parent=1 // pred_check_branch
      %88 = sbr.rel (0) target = $region25
    $region24: #{tpu_custom_call.1} parent=1 // pred_region
      %89 = dma.done [#allocation4], 512
    $region25: #{tpu_custom_call.1} parent=1 // pred_fallthru
      _
    %90 = vsyncpa [#allocation3], 1
    %91 = vsyncpa [#allocation4], 1
    %92 = vsyncpa [#allocation5], 1

</llo_original>
